<compile_context>
chip_gen: v7x
topology: tpu7x:2x2x1
jax: 0.10.0
libtpu: 0.0.40
codegen_flags: <defaults>
</compile_context>

<pallas_src>
import jax
import jax.numpy as jnp
from jax.experimental import pallas as pl
from jax.experimental.pallas import tpu as pltpu

_ANCHORS = 3           # the module hard-codes 3 anchor boxes
_G = 16                # pixels per matmul row-group (N = _G*(nc+5) >= 128 for nc+5 >= 8)
_MAX_BATCH_FOLD = 8    # cap on images per grid step (bounds kernel unroll to 24 dots)
_VMEM_BUDGET = 10 * 1024 * 1024   # double-buffered in+out blocks (lane-padded)


def _ceil_div(a, b):
    return -(-a // b)


def _round_up(a, b):
    return _ceil_div(a, b) * b


def _head_kernel(lhs_ref, w2_ref, b2_ref, o_ref):
    # lhs_ref: (bb, tr, K)     pixel-group rows; K = C*G on the lane axis
    # w2_ref:  (A, K, N)       block-diagonal expanded weight (VMEM-resident)
    # b2_ref:  (A, 1, N)       expanded bias (VMEM-resident)
    # o_ref:   (bb, A, tr, N)  output rows already in final interleaved order
    bb, num_anchors = o_ref.shape[0], o_ref.shape[1]
    for b in range(bb):                      # static unroll, bb <= _MAX_BATCH_FOLD
        xb = lhs_ref[b]                      # (tr, K)
        for a in range(num_anchors):         # static unroll, 3
            acc = jnp.dot(xb, w2_ref[a], preferred_element_type=jnp.float32)
            o_ref[b, a] = (acc + b2_ref[a]).astype(o_ref.dtype)


def predict_forward(x, weight, bias, num_classes):
    """1x1 conv + YOLO-style head reshape/permute (PyTorch `predict` module).

    Args:
      x:      (B, C, H, W) float32, NCHW
      weight: (Cout, C) conv weight squeezed from (Cout, C, 1, 1)
      bias:   (Cout,)
    Returns:
      (B, 3, H, W, num_classes + 5) float32
    """
    B, C, H, W = x.shape
    A = _ANCHORS
    P = num_classes + 5
    assert weight.shape == (A * P, C) and bias.shape == (A * P,)

    G = _G
    K = C * G                 # contraction (lane) width of a pixel-group row
    N = G * P                 # output lane width per anchor (128 for nc=3)
    HW = H * W
    R = _ceil_div(HW, G)      # number of pixel-group rows
    HW_p = R * G

    # ---- input regrouping: (B, C, HW) -> (B, R, C*G) pixel-group rows -------
    # One XLA transpose over the small (C f32/pixel) side; the expensive
    # (Cout f32/pixel) output side never leaves the kernel in the wrong layout.
    x_r = x.reshape(B, C, HW)
    if HW_p != HW:
        x_r = jnp.pad(x_r, ((0, 0), (0, 0), (0, HW_p - HW)))   # zero pad: safe
    lhs = x_r.reshape(B, C, R, G).transpose(0, 2, 1, 3).reshape(B, R, K)

    # ---- expanded block-diagonal weight / bias (built once, tiny) -----------
    # w2[a, k*G+g, g'*P+c] = weight[a*P+c, k] * (g == g')
    w_r = weight.reshape(A, P, C)                          # [a, c, k]
    eye_g = jnp.eye(G, dtype=weight.dtype)                 # [g, g']
    w2 = (w_r.transpose(0, 2, 1)[:, :, None, None, :]      # (A, C, 1, 1, P)
          * eye_g[None, None, :, :, None])                 # (1, 1, G, G, 1)
    w2 = w2.reshape(A, K, N)
    # b2[a, 0, g*P+c] = bias[a*P+c]
    b2 = jnp.tile(bias.reshape(A, 1, P), (1, G, 1)).reshape(A, 1, N)

    # ---- tiling policy -------------------------------------------------------
    # Per-(image,row) VMEM bytes, counting the lane padding of the K-wide input
    # block (K=64 pads to 128 lanes) and the A*N-wide output rows.
    row_bytes = 4 * (_round_up(K, 128) + A * _round_up(N, 128))
    cap_rows = max(8, (_VMEM_BUDGET // (2 * row_bytes)) // 8 * 8)   # /2: dbl buffer

    if R > cap_rows:
        bb, tr = 1, cap_rows                 # large image: tile rows, 1 image/step
    else:
        tr = R                               # whole image per step
        bb = max(1, min(B, _MAX_BATCH_FOLD, cap_rows // max(R, 1)))
        while B % bb:                        # keep batch-edge blocks full
            bb -= 1
        if _ceil_div(B, bb) < 2:             # would be a single grid step:
            if B >= 2:                       # give the v7x megacore >= 2 steps
                bb = max(1, B // 2)
            elif R >= 16:
                tr = min(R, _round_up(_ceil_div(R, 2), 8))
            # else: genuinely tiny problem; a single step is fine.
    grid = (_ceil_div(B, bb), _ceil_div(R, tr))

    cost = pl.CostEstimate(
        # Actual MXU flops (includes the xG block-diagonal zero padding).
        flops=2 * B * A * R * K * N,
        transcendentals=0,
        bytes_accessed=4 * (B * R * K + B * A * R * N + A * K * N + A * N),
    )

    out = pl.pallas_call(
        _head_kernel,
        out_shape=jax.ShapeDtypeStruct((B, A, R, N), x.dtype),
        grid=grid,
        in_specs=[
            pl.BlockSpec((bb, tr, K), lambda bi, ri: (bi, ri, 0)),
            pl.BlockSpec((A, K, N), lambda bi, ri: (0, 0, 0)),
            pl.BlockSpec((A, 1, N), lambda bi, ri: (0, 0, 0)),
        ],
        out_specs=pl.BlockSpec((bb, A, tr, N), lambda bi, ri: (bi, 0, ri, 0)),
        compiler_params=pltpu.CompilerParams(
            dimension_semantics=("parallel", "parallel")),
        cost_estimate=cost,
    )(lhs, w2, b2)

    # (B, A, R, N) -> (B, A, HW_p, P) is a pure metadata reshape:
    # row r, lane g*P+c  <->  pixel r*G+g, channel c.  No trailing permute pass.
    out = out.reshape(B, A, HW_p, P)
    if HW_p != HW:
        out = out[:, :, :HW, :]
    return out.reshape(B, A, H, W, P)


def _reference(x, weight, bias, num_classes):
    B, _, H, W = x.shape
    conv_out = jnp.einsum("bchw,oc->bohw", x, weight) + bias[None, :, None, None]
    return conv_out.reshape(B, 3, num_classes + 5, H, W).transpose(0, 1, 3, 4, 2)


if __name__ == "__main__":
    key = jax.random.PRNGKey(0)

    # Main case (module-consistent small shapes).
    B, C, H, W = 2, 4, 16, 16
    num_classes = 3
    Cout = (num_classes + 5) * 3  # 24
    kx, kw, kb = jax.random.split(key, 3)
    x = jax.random.normal(kx, (B, C, H, W), dtype=jnp.float32)
    weight = jax.random.normal(kw, (Cout, C), dtype=jnp.float32) * 0.05
    bias = jax.random.normal(kb, (Cout,), dtype=jnp.float32) * 0.05

    out = predict_forward(x, weight, bias, num_classes)
    out = jax.block_until_ready(out)
    ref = _reference(x, weight, bias, num_classes)
    assert out.shape == (B, 3, H, W, num_classes + 5), out.shape
    assert jnp.allclose(out, ref, atol=1e-5, rtol=1e-5)

    # Secondary case: odd spatial size (exercises the pixel-padding path) and B=1.
    B2, H2, W2 = 1, 6, 10
    kx2 = jax.random.fold_in(key, 1)
    x2 = jax.random.normal(kx2, (B2, C, H2, W2), dtype=jnp.float32)
    out2 = jax.block_until_ready(predict_forward(x2, weight, bias, num_classes))
    ref2 = _reference(x2, weight, bias, num_classes)
    assert out2.shape == (B2, 3, H2, W2, num_classes + 5), out2.shape
    assert jnp.allclose(out2, ref2, atol=1e-5, rtol=1e-5)

    print("KERNEL_OK")
</pallas_src>

<mosaic_0001>
module attributes {stable_mosaic.version = 11 : i64} {
  func.func @_head_kernel(%arg0: i32, %arg1: i32, %arg2: memref<1x16x64xf32, #tpu.memory_space<vmem>>, %arg3: memref<3x64x128xf32, #tpu.memory_space<vmem>>, %arg4: memref<3x1x128xf32, #tpu.memory_space<vmem>>, %arg5: memref<1x3x16x128xf32, #tpu.memory_space<vmem>>) attributes {dimension_semantics = [#tpu.dimension_semantics<parallel>, #tpu.dimension_semantics<parallel>], iteration_bounds = array<i64: 2, 1>, scalar_prefetch = 0 : i64, scratch_operands = 0 : i64, tpu.core_type = #tpu.core_type<tc>, window_params = [{transform_indices = @transform_0, window_bounds = array<i64: 1, 16, 64>}, {pipeline_mode = #tpu.pipeline_mode<synchronous>, transform_indices = @transform_1, window_bounds = array<i64: 3, 64, 128>}, {pipeline_mode = #tpu.pipeline_mode<synchronous>, transform_indices = @transform_2, window_bounds = array<i64: 3, 1, 128>}, {transform_indices = @transform_3, window_bounds = array<i64: 1, 3, 16, 128>}]} {
    %c0 = arith.constant 0 : index
    %c0_0 = arith.constant 0 : index
    %c0_1 = arith.constant 0 : index
    %0 = vector.load %arg2[%c0, %c0_0, %c0_1] : memref<1x16x64xf32, #tpu.memory_space<vmem>>, vector<1x16x64xf32>
    %1 = vector.shape_cast %0 : vector<1x16x64xf32> to vector<16x64xf32>
    %c0_2 = arith.constant 0 : index
    %c0_3 = arith.constant 0 : index
    %c0_4 = arith.constant 0 : index
    %2 = vector.load %arg3[%c0_2, %c0_3, %c0_4] : memref<3x64x128xf32, #tpu.memory_space<vmem>>, vector<1x64x128xf32>
    %3 = vector.shape_cast %2 : vector<1x64x128xf32> to vector<64x128xf32>
    %cst = arith.constant dense<0.000000e+00> : vector<16x128xf32>
    %4 = tpu.matmul %1, %3, %cst {dimension_numbers = #tpu.dot_dimension_numbers<[1], [0], [0], [1], [0, 0, 1, 1], [], []>} : vector<16x64xf32>, vector<64x128xf32>, vector<16x128xf32> -> vector<16x128xf32>
    %c0_5 = arith.constant 0 : index
    %c0_6 = arith.constant 0 : index
    %c0_7 = arith.constant 0 : index
    %5 = vector.load %arg4[%c0_5, %c0_6, %c0_7] : memref<3x1x128xf32, #tpu.memory_space<vmem>>, vector<1x1x128xf32>
    %6 = vector.shape_cast %5 : vector<1x1x128xf32> to vector<1x128xf32>
    %7 = vector.broadcast %6 : vector<1x128xf32> to vector<16x128xf32>
    %8 = arith.addf %4, %7 : vector<16x128xf32>
    %c0_8 = arith.constant 0 : index
    %c0_9 = arith.constant 0 : index
    %c0_10 = arith.constant 0 : index
    %c0_11 = arith.constant 0 : index
    %9 = vector.load %arg5[%c0_8, %c0_9, %c0_10, %c0_11] : memref<1x3x16x128xf32, #tpu.memory_space<vmem>>, vector<1x1x16x128xf32>
    %10 = vector.shape_cast %9 : vector<1x1x16x128xf32> to vector<16x128xf32>
    %11 = vector.shape_cast %8 : vector<16x128xf32> to vector<1x1x16x128xf32>
    tpu.vector_store %arg5[%c0_8, %c0_9, %c0_10, %c0_11], %11 {strides = array<i32>} : memref<1x3x16x128xf32, #tpu.memory_space<vmem>>, vector<1x1x16x128xf32>,
    %c1 = arith.constant 1 : index
    %c0_12 = arith.constant 0 : index
    %c0_13 = arith.constant 0 : index
    %12 = vector.load %arg3[%c1, %c0_12, %c0_13] : memref<3x64x128xf32, #tpu.memory_space<vmem>>, vector<1x64x128xf32>
    %13 = vector.shape_cast %12 : vector<1x64x128xf32> to vector<64x128xf32>
    %cst_14 = arith.constant dense<0.000000e+00> : vector<16x128xf32>
    %14 = tpu.matmul %1, %13, %cst_14 {dimension_numbers = #tpu.dot_dimension_numbers<[1], [0], [0], [1], [0, 0, 1, 1], [], []>} : vector<16x64xf32>, vector<64x128xf32>, vector<16x128xf32> -> vector<16x128xf32>
    %c1_15 = arith.constant 1 : index
    %c0_16 = arith.constant 0 : index
    %c0_17 = arith.constant 0 : index
    %15 = vector.load %arg4[%c1_15, %c0_16, %c0_17] : memref<3x1x128xf32, #tpu.memory_space<vmem>>, vector<1x1x128xf32>
    %16 = vector.shape_cast %15 : vector<1x1x128xf32> to vector<1x128xf32>
    %17 = vector.broadcast %16 : vector<1x128xf32> to vector<16x128xf32>
    %18 = arith.addf %14, %17 : vector<16x128xf32>
    %c0_18 = arith.constant 0 : index
    %c1_19 = arith.constant 1 : index
    %c0_20 = arith.constant 0 : index
    %c0_21 = arith.constant 0 : index
    %19 = vector.load %arg5[%c0_18, %c1_19, %c0_20, %c0_21] : memref<1x3x16x128xf32, #tpu.memory_space<vmem>>, vector<1x1x16x128xf32>
    %20 = vector.shape_cast %19 : vector<1x1x16x128xf32> to vector<16x128xf32>
    %21 = vector.shape_cast %18 : vector<16x128xf32> to vector<1x1x16x128xf32>
    tpu.vector_store %arg5[%c0_18, %c1_19, %c0_20, %c0_21], %21 {strides = array<i32>} : memref<1x3x16x128xf32, #tpu.memory_space<vmem>>, vector<1x1x16x128xf32>,
    %c2 = arith.constant 2 : index
    %c0_22 = arith.constant 0 : index
    %c0_23 = arith.constant 0 : index
    %22 = vector.load %arg3[%c2, %c0_22, %c0_23] : memref<3x64x128xf32, #tpu.memory_space<vmem>>, vector<1x64x128xf32>
    %23 = vector.shape_cast %22 : vector<1x64x128xf32> to vector<64x128xf32>
    %cst_24 = arith.constant dense<0.000000e+00> : vector<16x128xf32>
    %24 = tpu.matmul %1, %23, %cst_24 {dimension_numbers = #tpu.dot_dimension_numbers<[1], [0], [0], [1], [0, 0, 1, 1], [], []>} : vector<16x64xf32>, vector<64x128xf32>, vector<16x128xf32> -> vector<16x128xf32>
    %c2_25 = arith.constant 2 : index
    %c0_26 = arith.constant 0 : index
    %c0_27 = arith.constant 0 : index
    %25 = vector.load %arg4[%c2_25, %c0_26, %c0_27] : memref<3x1x128xf32, #tpu.memory_space<vmem>>, vector<1x1x128xf32>
    %26 = vector.shape_cast %25 : vector<1x1x128xf32> to vector<1x128xf32>
    %27 = vector.broadcast %26 : vector<1x128xf32> to vector<16x128xf32>
    %28 = arith.addf %24, %27 : vector<16x128xf32>
    %c0_28 = arith.constant 0 : index
    %c2_29 = arith.constant 2 : index
    %c0_30 = arith.constant 0 : index
    %c0_31 = arith.constant 0 : index
    %29 = vector.load %arg5[%c0_28, %c2_29, %c0_30, %c0_31] : memref<1x3x16x128xf32, #tpu.memory_space<vmem>>, vector<1x1x16x128xf32>
    %30 = vector.shape_cast %29 : vector<1x1x16x128xf32> to vector<16x128xf32>
    %31 = vector.shape_cast %28 : vector<16x128xf32> to vector<1x1x16x128xf32>
    tpu.vector_store %arg5[%c0_28, %c2_29, %c0_30, %c0_31], %31 {strides = array<i32>} : memref<1x3x16x128xf32, #tpu.memory_space<vmem>>, vector<1x1x16x128xf32>,
    return
  }
  func.func @transform_0(%arg0: i32, %arg1: i32) -> (i32, i32, i32) {
    %c0_i32 = arith.constant 0 : i32
    %c0_i32_0 = arith.constant 0 : i32
    return %arg0, %arg1, %c0_i32 : i32, i32, i32
  }
  func.func @transform_1(%arg0: i32, %arg1: i32) -> (i32, i32, i32) {
    %c0_i32 = arith.constant 0 : i32
    %c0_i32_0 = arith.constant 0 : i32
    %c0_i32_1 = arith.constant 0 : i32
    %c0_i32_2 = arith.constant 0 : i32
    return %c0_i32, %c0_i32_0, %c0_i32_1 : i32, i32, i32
  }
  func.func @transform_2(%arg0: i32, %arg1: i32) -> (i32, i32, i32) {
    %c0_i32 = arith.constant 0 : i32
    %c0_i32_0 = arith.constant 0 : i32
    %c0_i32_1 = arith.constant 0 : i32
    %c0_i32_2 = arith.constant 0 : i32
    return %c0_i32, %c0_i32_0, %c0_i32_1 : i32, i32, i32
  }
  func.func @transform_3(%arg0: i32, %arg1: i32) -> (i32, i32, i32, i32) {
    %c0_i32 = arith.constant 0 : i32
    %c0_i32_0 = arith.constant 0 : i32
    %c0_i32_1 = arith.constant 0 : i32
    return %arg0, %c0_i32, %arg1, %c0_i32_0 : i32, i32, i32, i32
  }
}

</mosaic_0001>

<llo_original>
// kernel: tpu_custom_call.1
$region0: #{tpu_custom_call.1}
  #allocation0 [shape = 'u32[]', space=smem, size = 0x4, offset = 0x4, fixed_abs, tag = 'smem constant byte address 0x4 - core index']
  #allocation1 [shape = 'u32[144,128]{1,0:T(1,128)}', space=vmem, size = 0x12000, scoped, tag = 'internal scratch']
  %s0 = inlined_call_operand.hbm [shape: f32[2,16,64], index: 0, kind: input, shape index: {}]
  %s1 = inlined_call_operand.hbm [shape: f32[3,64,128], index: 1, kind: input, shape index: {}]
  %s2 = inlined_call_operand.vmem [shape: f32[3,1,128], index: 2, kind: input, shape index: {}]
  %s3 = inlined_call_operand.hbm [shape: f32[2,3,16,128], index: 3, kind: output, shape index: {}]
  %s4 = sld [smem:[#allocation0]]
  $region53: #{tpu_custom_call.1} parent=0
    _
  %s6 = ssub.s32 1, %s4
  %s7 = scalar_select 0, %s6, %s4
  $region1: #{tpu_custom_call.1} parent=0
    #allocation2 [shape = 'u8[16384]{0}', space=vmem, size = 0x4000, scoped, tag = 'input window, operand 0']
    #allocation3 [shape = 's32[2]{0}', space=sflag, size = 0x8, scoped, tag = 'scoped memory for tpu_custom_call.1']
    #allocation4 [shape = 's32[2]{0}', space=sflag, size = 0x8, scoped, tag = 'scoped memory for tpu_custom_call.1']
    #allocation5 [shape = 'u8[98304]{0}', space=vmem, size = 0x18000, scoped, tag = 'input window, operand 1, single buffered']
    #allocation6 [shape = 's32[1]{0}', space=sflag, size = 0x4, scoped, tag = 'scoped memory for tpu_custom_call.1']
    #allocation7 [shape = 'u8[49152]{0}', space=vmem, size = 0xc000, scoped, tag = 'output window, operand 0']
    %8 = vsyncpa [#allocation3], 0
    %s9 = scalar_lea.sflag [#allocation3], 1
    %10 = vsyncpa %s9, 0
    %11 = vsyncpa [#allocation6], 0
    %12 = vsyncpa [#allocation4], 0
    %s13 = scalar_lea.sflag [#allocation4], 1
    %14 = vsyncpa %s13, 0
    loop: start=0, step=1, limit=4
    $region2: #{tpu_custom_call.1} parent=1 // loop_pre_header
      _
    $region3: #{tpu_custom_call.1} parent=1 // loop_header
      %s16 = sphi 0, %s20
      %p17 = scmp.ge.s32.totalorder %s16, 4
      %s23 = sphi 0, %s35
      %s24 = sphi 0, %s31
      %s25 = sphi 0, %s23
      %s26 = sphi 0, %s24
      %s27 = sphi 0, %s25
      %s28 = sphi 0, %s26
      %s40 = sphi 0, %s42
      %s43 = sphi 0, %s40
      %s44 = sphi 0, %s43
      %s60 = sphi 0, %s44
      %s64 = sphi 0, %s64
      %s66 = sphi 0, %s64
      %s67 = sphi 0, %s66
      %s81 = sphi 0, %s67
      %s85 = sphi 0, %s85
      %s87 = sphi 0, %s85
      %s88 = sphi 0, %s87
      %s102 = sphi 0, %s88
      %s110 = sphi 0, %s112
      %s113 = sphi 0, %s110
      %s114 = sphi 0, %s113
      %s130 = sphi 0, %s114
    $region4: #{tpu_custom_call.1} parent=1 // loop_header_branch
      %19 = sbr.rel (%p17) target = $region8
    $region5: #{tpu_custom_call.1} parent=1 // loop_body
      %s21 = ssub.s32 %s16, 1
      %s22 = ssub.s32 %s16, 2
      %s29 = sadd.s32 1, %s24
      %p30 = scmp.ge.s32.totalorder %s29, 1
      %s31 = scalar_select %p30, 0, %s29
      %s32 = sadd.s32 1, %s23
      %s33 = scalar_select %p30, %s32, %s23
      %p34 = scmp.ge.s32.totalorder %s33, 2
      %s35 = scalar_select %p34, 0, %s33
      %s36 = ssub.s32 %s23, %s35
      %s37 = ssub.s32 %s24, %s31
      %s38 = sor.u32 %s36, %s37
      %p39 = scmp.eq.s32.totalorder %s38, 0
      %s41 = sadd.s32 %s40, 1
      %s42 = scalar_select %p39, %s40, %s41
      %p45 = pneg %p39
      %p46 = scmp.eq.s32.totalorder %s16, 1
      %p47 = por %p45, %p46
      %p48 = scmp.ne.s32.totalorder %s40, %s43
      %p49 = scmp.eq.s32.totalorder %s16, 0
      %p50 = por %p48, %p49
      %p51 = scmp.ne.s32.totalorder %s40, %s43
      %p52 = scmp.eq.s32.totalorder %s21, 1
      %p53 = por %p51, %p52
      %p54 = scmp.ne.s32.totalorder %s43, %s44
      %p55 = scmp.eq.s32.totalorder %s21, 0
      %p56 = por %p54, %p55
      %p57 = scmp.ne.s32.totalorder %s43, %s44
      %p58 = scmp.eq.s32.totalorder %s22, 1
      %p59 = por %p57, %p58
      %p61 = scmp.ne.s32.totalorder %s44, %s60
      %p62 = scmp.eq.s32.totalorder %s22, 0
      %p63 = por %p61, %p62
      %s65 = sadd.s32 %s64, 1
      %p68 = scmp.eq.s32.totalorder %s16, 1
      %p69 = scmp.ne.s32.totalorder %s64, %s66
      %p70 = scmp.eq.s32.totalorder %s16, 0
      %p71 = por %p69, %p70
      %p72 = scmp.ne.s32.totalorder %s64, %s66
      %p73 = scmp.eq.s32.totalorder %s21, 1
      %p74 = por %p72, %p73
      %p75 = scmp.ne.s32.totalorder %s66, %s67
      %p76 = scmp.eq.s32.totalorder %s21, 0
      %p77 = por %p75, %p76
      %p78 = scmp.ne.s32.totalorder %s66, %s67
      %p79 = scmp.eq.s32.totalorder %s22, 1
      %p80 = por %p78, %p79
      %p82 = scmp.ne.s32.totalorder %s67, %s81
      %p83 = scmp.eq.s32.totalorder %s22, 0
      %p84 = por %p82, %p83
      %s86 = sadd.s32 %s85, 1
      %p89 = scmp.eq.s32.totalorder %s16, 1
      %p90 = scmp.ne.s32.totalorder %s85, %s87
      %p91 = scmp.eq.s32.totalorder %s16, 0
      %p92 = por %p90, %p91
      %p93 = scmp.ne.s32.totalorder %s85, %s87
      %p94 = scmp.eq.s32.totalorder %s21, 1
      %p95 = por %p93, %p94
      %p96 = scmp.ne.s32.totalorder %s87, %s88
      %p97 = scmp.eq.s32.totalorder %s21, 0
      %p98 = por %p96, %p97
      %p99 = scmp.ne.s32.totalorder %s87, %s88
      %p100 = scmp.eq.s32.totalorder %s22, 1
      %p101 = por %p99, %p100
      %p103 = scmp.ne.s32.totalorder %s88, %s102
      %p104 = scmp.eq.s32.totalorder %s22, 0
      %p105 = por %p103, %p104
      %s106 = ssub.s32 %s23, %s35
      %s107 = ssub.s32 %s24, %s31
      %s108 = sor.u32 %s106, %s107
      %p109 = scmp.eq.s32.totalorder %s108, 0
      %s111 = sadd.s32 %s110, 1
      %s112 = scalar_select %p109, %s110, %s111
      %p115 = pneg %p109
      %p116 = scmp.eq.s32.totalorder %s16, 1
      %p117 = por %p115, %p116
      %p118 = scmp.ne.s32.totalorder %s110, %s113
      %p119 = scmp.eq.s32.totalorder %s16, 0
      %p120 = por %p118, %p119
      %p121 = scmp.ne.s32.totalorder %s110, %s113
      %p122 = scmp.eq.s32.totalorder %s21, 1
      %p123 = por %p121, %p122
      %p124 = scmp.ne.s32.totalorder %s113, %s114
      %p125 = scmp.eq.s32.totalorder %s21, 0
      %p126 = por %p124, %p125
      %p127 = scmp.ne.s32.totalorder %s113, %s114
      %p128 = scmp.eq.s32.totalorder %s22, 1
      %p129 = por %p127, %p128
      %p131 = scmp.ne.s32.totalorder %s114, %s130
      %p132 = scmp.eq.s32.totalorder %s22, 0
      %p133 = por %p131, %p132
      %p134 = scmp.le.s32.totalorder 1, %s16
      %p135 = scmp.lt.s32.totalorder %s16, 3
      %p136 = pnand %p134, %p135
      %p137 = pneg %p136
      // Predicated region
      $region9: #{tpu_custom_call.1} parent=5 // pred_check
        _
      $region10: #{tpu_custom_call.1} parent=5 // pred_check_branch
        %139 = sbr.rel (%p136) target = $region12
      $region11: #{tpu_custom_call.1} parent=5 // pred_region
        %s140 = ssub.s32 %s16, 1
        // Predicated region
        $region13: #{tpu_custom_call.1} parent=11 // pred_check
          %p141 = pneg %p77
        $region14: #{tpu_custom_call.1} parent=11 // pred_check_branch
          %143 = sbr.rel (%p141) target = $region16
        $region15: #{tpu_custom_call.1} parent=11 // pred_region
          %s145 = ssub.s32 3072, 3072
          %146 = vsyncadd [#allocation6], %s145
          %s147 = sshll.u32 [#allocation5], 4
          %s148 = int_to_ptr.vmem [resolvable:$true] %s147
          %153 = dma.hbm_to_vmem [thread:$0]  %s1, 3072, %s148, [#allocation6], 128, 128, 8
        $region16: #{tpu_custom_call.1} parent=11 // pred_fallthru
          _
        // Predicated region
        $region17: #{tpu_custom_call.1} parent=11 // pred_check
          %p154 = pneg %p98
        $region18: #{tpu_custom_call.1} parent=11 // pred_check_branch
          %156 = sbr.rel (%p154) target = $region20
        $region19: #{tpu_custom_call.1} parent=11 // pred_region
          _
        $region20: #{tpu_custom_call.1} parent=11 // pred_fallthru
          _
      $region12: #{tpu_custom_call.1} parent=5 // pred_fallthru
        _
      %p157 = scmp.lt.s32.totalorder %s16, 2
      // Predicated region
      $region21: #{tpu_custom_call.1} parent=5 // pred_check
        %p158 = pneg %p157
      $region22: #{tpu_custom_call.1} parent=5 // pred_check_branch
        %160 = sbr.rel (%p158) target = $region24
      $region23: #{tpu_custom_call.1} parent=5 // pred_region
        // Predicated region
        $region25: #{tpu_custom_call.1} parent=23 // pred_check
          %p161 = pneg %p50
        $region26: #{tpu_custom_call.1} parent=23 // pred_check_branch
          %163 = sbr.rel (%p161) target = $region28
        $region27: #{tpu_custom_call.1} parent=23 // pred_region
          %s164 = sand.u32 %s40, 1
          %s165 = scalar_lea.sflag [#allocation3], %s164
          %s166 = sand.u32 %s40, 1
          %s167 = smul.addr %s166, 16
          %s168 = scalar_lea.vmem [#allocation2], %s167
          %s169 = smul.u32 2, %s24
          %s171 = ssub.s32 256, 256
          %172 = vsyncadd %s165, %s171
          %s173 = smul.addr %s23, 2
          %s174 = sadd.s32 %s169, %s173
          %s175 = smul.addr %s174, 128
          %s176 = scalar_lea.hbm %s0, %s175
          %s177 = sshll.u32 %s168, 4
          %s178 = int_to_ptr.vmem [resolvable:$true] %s177
          %183 = dma.hbm_to_vmem [thread:$0]  %s176, 256, %s178, %s165, 128, 128, 8
        $region28: #{tpu_custom_call.1} parent=23 // pred_fallthru
          _
      $region24: #{tpu_custom_call.1} parent=5 // pred_fallthru
        _
      %p184 = scmp.le.s32.totalorder 1, %s16
      %p185 = scmp.lt.s32.totalorder %s16, 3
      %p186 = pnand %p184, %p185
      %p187 = pneg %p186
      // Predicated region
      $region29: #{tpu_custom_call.1} parent=5 // pred_check
        _
      $region30: #{tpu_custom_call.1} parent=5 // pred_check_branch
        %189 = sbr.rel (%p186) target = $region32
      $region31: #{tpu_custom_call.1} parent=5 // pred_region
        %s190 = ssub.s32 %s16, 1
        %s191 = sand.u32 %s43, 1
        %s192 = scalar_lea.sflag [#allocation3], %s191
        %s193 = sand.u32 %s43, 1
        %s194 = smul.addr %s193, 16
        %s195 = scalar_lea.vmem [#allocation2], %s194
        // Predicated region
        $region33: #{tpu_custom_call.1} parent=31 // pred_check
          %p196 = pneg %p56
        $region34: #{tpu_custom_call.1} parent=31 // pred_check_branch
          %198 = sbr.rel (%p196) target = $region36
        $region35: #{tpu_custom_call.1} parent=31 // pred_region
          %199 = dma.done %s192, 256
        $region36: #{tpu_custom_call.1} parent=31 // pred_fallthru
          _
        // Predicated region
        $region37: #{tpu_custom_call.1} parent=31 // pred_check
          %p200 = pneg %p77
        $region38: #{tpu_custom_call.1} parent=31 // pred_check_branch
          %202 = sbr.rel (%p200) target = $region40
        $region39: #{tpu_custom_call.1} parent=31 // pred_region
          %203 = dma.done [#allocation6], 3072
        $region40: #{tpu_custom_call.1} parent=31 // pred_fallthru
          _
        %s204 = sand.u32 %s43, 1
        %s205 = scalar_lea.sflag [#allocation3], %s204
        %s206 = sand.u32 %s43, 1
        %s207 = smul.addr %s206, 16
        %s208 = scalar_lea.vmem [#allocation2], %s207
        %p209 = pneg %p56
        %p210 = pneg %p53
        %p211 = pneg %p77
        %p212 = pneg %p74
        %p213 = pneg %p98
        %p214 = pneg %p95
        %p215 = pneg %p126
        %p216 = pneg %p123
        %s217 = sand.u32 %s113, 1
        %s218 = scalar_lea.sflag [#allocation4], %s217
        %s219 = sand.u32 %s113, 1
        %s220 = smul.addr %s219, 48
        %s221 = scalar_lea.vmem [#allocation7], %s220
        %s222 = smul.u32 2, %s26
        %s223 = smul.u32 2, %s26
        %v224 = vld [vmem:[%s195] sm:$0xff]
        %v225 = vld [vmem:[%s195 + $0x8] sm:$0xff]
        %v226 = vld [vmem:[#allocation5] sm:$0xff]
        %v227 = vld [vmem:[#allocation5 + $0x8] sm:$0xff]
        %v228 = vld [vmem:[#allocation5 + $0x10] sm:$0xff]
        %v229 = vld [vmem:[#allocation5 + $0x18] sm:$0xff]
        %v230 = vld [vmem:[#allocation5 + $0x20] sm:$0xff]
        %v231 = vld [vmem:[#allocation5 + $0x28] sm:$0xff]
        %v232 = vld [vmem:[#allocation5 + $0x30] sm:$0xff]
        %v233 = vld [vmem:[#allocation5 + $0x38] sm:$0xff]
        %v234 = vld [vmem:[%s2] sm:$0x1]
        %v236 = vlaneseq
        %v237 = vshrl.u32 %v236, 7
        %v238 = vsub.s32 0, %v237
        %v239 = vrot.slane %v234, %v238
        %vm241 = vcmask 523264
        %v243 = vsel %vm241, %v224, 0
        %v246 = vsel %vm241, %v225, 0
        %248 = vmatprep.subr.mxu0 0.0
        %249 = vmatpush1.msra.mxu0 %v226
        %250 = vmatprep.subr.mxu0 0.0
        %251 = vmatpush1.msra.mxu0 %v227
        %252 = vmatprep.subr.mxu0 0.0
        %253 = vmatpush1.msra.mxu0 %v228
        %254 = vmatprep.subr.mxu0 0.0
        %255 = vmatpush1.msra.mxu0 %v229
        %256 = vmatprep.subr.mxu0 0.0
        %257 = vmatpush1.msra.mxu0 %v230
        %258 = vmatprep.subr.mxu0 0.0
        %259 = vmatpush1.msra.mxu0 %v231
        %260 = vmatprep.subr.mxu0 0.0
        %261 = vmatpush1.msra.mxu0 %v232
        %262 = vmatprep.subr.mxu0 0.0
        %263 = vmatpush1.msra.mxu0 %v233
        %264 = vmatprep.subr.mxu0 0.0
        %265 = vmatpush1.msra.mxu0 0.0
        %266 = vmatprep.subr.mxu0 0.0
        %267 = vmatpush1.msra.mxu0 0.0
        %268 = vmatprep.subr.mxu0 0.0
        %269 = vmatpush1.msra.mxu0 0.0
        %270 = vmatprep.subr.mxu0 0.0
        %271 = vmatpush1.msra.mxu0 0.0
        %272 = vmatprep.subr.mxu0 0.0
        %273 = vmatpush1.msra.mxu0 0.0
        %274 = vmatprep.subr.mxu0 0.0
        %275 = vmatpush1.msra.mxu0 0.0
        %276 = vmatprep.subr.mxu0 0.0
        %277 = vmatpush1.msra.mxu0 0.0
        %278 = vmatprep.subr.mxu0 0.0
        %279 = vmatpush1.msra.mxu0 0.0
        %280 = vmatprep.subr.mxu0 0.0
        %281 = vmatpush1.msra.mxu0 0.0
        %282 = vmatprep.subr.mxu0 0.0
        %283 = vmatpush1.msra.mxu0 0.0
        %284 = vmatprep.subr.mxu0 0.0
        %285 = vmatpush1.msra.mxu0 0.0
        %286 = vmatprep.subr.mxu0 0.0
        %287 = vmatpush1.msra.mxu0 0.0
        %288 = vmatprep.subr.mxu0 0.0
        %289 = vmatpush1.msra.mxu0 0.0
        %290 = vmatprep.subr.mxu0 0.0
        %291 = vmatpush1.msra.mxu0 0.0
        %292 = vmatprep.subr.mxu0 0.0
        %293 = vmatpush1.msra.mxu0 0.0
        %294 = vmatprep.subr.mxu0 0.0
        %295 = vmatpush1.msra.mxu0 0.0
        %296 = vmatprep.subr.mxu0 0.0
        %297 = vmatpush1.msra.mxu0 0.0
        %298 = vmatprep.subr.mxu0 0.0
        %299 = vmatpush1.msra.mxu0 0.0
        %300 = vmatprep.subr.mxu0 0.0
        %301 = vmatpush1.msra.mxu0 0.0
        %302 = vmatprep.subr.mxu0 0.0
        %303 = vmatpush1.msra.mxu0 0.0
        %304 = vmatprep.subr.mxu0 0.0
        %305 = vmatpush1.msra.mxu0 0.0
        %306 = vmatprep.subr.mxu0 0.0
        %307 = vmatpush1.msra.mxu0 0.0
        %308 = vmatprep.subr.mxu0 0.0
        %309 = vmatpush1.msra.mxu0 0.0
        %310 = vmatprep.subr.mxu0 0.0
        %311 = vmatpush1.msra.mxu0 0.0
        %312 = vmatprep.mubr.f32.mxu0 0.0
        %313 = vmatmul.mubr.f32.gmra.mrb[0].mxu0 %v243
        %v314 = vpop.f32.mrb[0].mxu0
        %v315 = vadd.f32 %v239, %v314
        %v316 = vpop.f32.mrb[0].mxu0
        %317 = vmatprep.mubr.f32.mxu0 0.0
        %318 = vmatmul.mubr.f32.gmra.mrb[0].mxu0 %v246
        %v319 = vpop.f32.mrb[0].mxu0
        %v320 = vadd.f32 %v239, %v319
        %v321 = vpop.f32.mrb[0].mxu0
        %322 = vdwg.mxu0
        %323 = vst [vmem:[%s221] sm:$0xff] %v315
        %324 = vst [vmem:[%s221 + $0x8] sm:$0xff] %v320
        %s325 = scalar_lea.vmem [#allocation5], 64
        %v326 = vld [vmem:[%s325] sm:$0xff]
        %v327 = vld [vmem:[%s325 + $0x8] sm:$0xff]
        %v328 = vld [vmem:[%s325 + $0x10] sm:$0xff]
        %v329 = vld [vmem:[%s325 + $0x18] sm:$0xff]
        %v330 = vld [vmem:[%s325 + $0x20] sm:$0xff]
        %v331 = vld [vmem:[%s325 + $0x28] sm:$0xff]
        %v332 = vld [vmem:[%s325 + $0x30] sm:$0xff]
        %v333 = vld [vmem:[%s325 + $0x38] sm:$0xff]
        %s334 = scalar_lea.vmem %s2, 1
        %v335 = vld [vmem:[%s334] sm:$0x1]
        %v337 = vlaneseq
        %v338 = vshrl.u32 %v337, 7
        %v339 = vsub.s32 0, %v338
        %v340 = vrot.slane %v335, %v339
        %342 = vmatprep.subr.mxu0 0.0
        %343 = vmatpush1.msra.mxu0 %v326
        %344 = vmatprep.subr.mxu0 0.0
        %345 = vmatpush1.msra.mxu0 %v327
        %346 = vmatprep.subr.mxu0 0.0
        %347 = vmatpush1.msra.mxu0 %v328
        %348 = vmatprep.subr.mxu0 0.0
        %349 = vmatpush1.msra.mxu0 %v329
        %350 = vmatprep.subr.mxu0 0.0
        %351 = vmatpush1.msra.mxu0 %v330
        %352 = vmatprep.subr.mxu0 0.0
        %353 = vmatpush1.msra.mxu0 %v331
        %354 = vmatprep.subr.mxu0 0.0
        %355 = vmatpush1.msra.mxu0 %v332
        %356 = vmatprep.subr.mxu0 0.0
        %357 = vmatpush1.msra.mxu0 %v333
        %358 = vmatprep.subr.mxu0 0.0
        %359 = vmatpush1.msra.mxu0 0.0
        %360 = vmatprep.subr.mxu0 0.0
        %361 = vmatpush1.msra.mxu0 0.0
        %362 = vmatprep.subr.mxu0 0.0
        %363 = vmatpush1.msra.mxu0 0.0
        %364 = vmatprep.subr.mxu0 0.0
        %365 = vmatpush1.msra.mxu0 0.0
        %366 = vmatprep.subr.mxu0 0.0
        %367 = vmatpush1.msra.mxu0 0.0
        %368 = vmatprep.subr.mxu0 0.0
        %369 = vmatpush1.msra.mxu0 0.0
        %370 = vmatprep.subr.mxu0 0.0
        %371 = vmatpush1.msra.mxu0 0.0
        %372 = vmatprep.subr.mxu0 0.0
        %373 = vmatpush1.msra.mxu0 0.0
        %374 = vmatprep.subr.mxu0 0.0
        %375 = vmatpush1.msra.mxu0 0.0
        %376 = vmatprep.subr.mxu0 0.0
        %377 = vmatpush1.msra.mxu0 0.0
        %378 = vmatprep.subr.mxu0 0.0
        %379 = vmatpush1.msra.mxu0 0.0
        %380 = vmatprep.subr.mxu0 0.0
        %381 = vmatpush1.msra.mxu0 0.0
        %382 = vmatprep.subr.mxu0 0.0
        %383 = vmatpush1.msra.mxu0 0.0
        %384 = vmatprep.subr.mxu0 0.0
        %385 = vmatpush1.msra.mxu0 0.0
        %386 = vmatprep.subr.mxu0 0.0
        %387 = vmatpush1.msra.mxu0 0.0
        %388 = vmatprep.subr.mxu0 0.0
        %389 = vmatpush1.msra.mxu0 0.0
        %390 = vmatprep.subr.mxu0 0.0
        %391 = vmatpush1.msra.mxu0 0.0
        %392 = vmatprep.subr.mxu0 0.0
        %393 = vmatpush1.msra.mxu0 0.0
        %394 = vmatprep.subr.mxu0 0.0
        %395 = vmatpush1.msra.mxu0 0.0
        %396 = vmatprep.subr.mxu0 0.0
        %397 = vmatpush1.msra.mxu0 0.0
        %398 = vmatprep.subr.mxu0 0.0
        %399 = vmatpush1.msra.mxu0 0.0
        %400 = vmatprep.subr.mxu0 0.0
        %401 = vmatpush1.msra.mxu0 0.0
        %402 = vmatprep.subr.mxu0 0.0
        %403 = vmatpush1.msra.mxu0 0.0
        %404 = vmatprep.subr.mxu0 0.0
        %405 = vmatpush1.msra.mxu0 0.0
        %406 = vmatprep.mubr.f32.mxu0 0.0
        %407 = vmatmul.mubr.f32.gmra.mrb[0].mxu0 %v243
        %v408 = vpop.f32.mrb[0].mxu0
        %v409 = vadd.f32 %v340, %v408
        %v410 = vpop.f32.mrb[0].mxu0
        %411 = vmatprep.mubr.f32.mxu0 0.0
        %412 = vmatmul.mubr.f32.gmra.mrb[0].mxu0 %v246
        %v413 = vpop.f32.mrb[0].mxu0
        %v414 = vadd.f32 %v340, %v413
        %v415 = vpop.f32.mrb[0].mxu0
        %416 = vdwg.mxu0
        %s417 = scalar_lea.vmem %s221, 16 [#allocation7]
        %418 = vst [vmem:[%s417] sm:$0xff] %v409
        %419 = vst [vmem:[%s417 + $0x8] sm:$0xff] %v414
        %s420 = scalar_lea.vmem [#allocation5], 128
        %v421 = vld [vmem:[%s420] sm:$0xff]
        %v422 = vld [vmem:[%s420 + $0x8] sm:$0xff]
        %v423 = vld [vmem:[%s420 + $0x10] sm:$0xff]
        %v424 = vld [vmem:[%s420 + $0x18] sm:$0xff]
        %v425 = vld [vmem:[%s420 + $0x20] sm:$0xff]
        %v426 = vld [vmem:[%s420 + $0x28] sm:$0xff]
        %v427 = vld [vmem:[%s420 + $0x30] sm:$0xff]
        %v428 = vld [vmem:[%s420 + $0x38] sm:$0xff]
        %s429 = scalar_lea.vmem %s2, 2
        %v430 = vld [vmem:[%s429] sm:$0x1]
        %v432 = vlaneseq
        %v433 = vshrl.u32 %v432, 7
        %v434 = vsub.s32 0, %v433
        %v435 = vrot.slane %v430, %v434
        %437 = vmatprep.subr.mxu0 0.0
        %438 = vmatpush1.msra.mxu0 %v421
        %439 = vmatprep.subr.mxu0 0.0
        %440 = vmatpush1.msra.mxu0 %v422
        %441 = vmatprep.subr.mxu0 0.0
        %442 = vmatpush1.msra.mxu0 %v423
        %443 = vmatprep.subr.mxu0 0.0
        %444 = vmatpush1.msra.mxu0 %v424
        %445 = vmatprep.subr.mxu0 0.0
        %446 = vmatpush1.msra.mxu0 %v425
        %447 = vmatprep.subr.mxu0 0.0
        %448 = vmatpush1.msra.mxu0 %v426
        %449 = vmatprep.subr.mxu0 0.0
        %450 = vmatpush1.msra.mxu0 %v427
        %451 = vmatprep.subr.mxu0 0.0
        %452 = vmatpush1.msra.mxu0 %v428
        %453 = vmatprep.subr.mxu0 0.0
        %454 = vmatpush1.msra.mxu0 0.0
        %455 = vmatprep.subr.mxu0 0.0
        %456 = vmatpush1.msra.mxu0 0.0
        %457 = vmatprep.subr.mxu0 0.0
        %458 = vmatpush1.msra.mxu0 0.0
        %459 = vmatprep.subr.mxu0 0.0
        %460 = vmatpush1.msra.mxu0 0.0
        %461 = vmatprep.subr.mxu0 0.0
        %462 = vmatpush1.msra.mxu0 0.0
        %463 = vmatprep.subr.mxu0 0.0
        %464 = vmatpush1.msra.mxu0 0.0
        %465 = vmatprep.subr.mxu0 0.0
        %466 = vmatpush1.msra.mxu0 0.0
        %467 = vmatprep.subr.mxu0 0.0
        %468 = vmatpush1.msra.mxu0 0.0
        %469 = vmatprep.subr.mxu0 0.0
        %470 = vmatpush1.msra.mxu0 0.0
        %471 = vmatprep.subr.mxu0 0.0
        %472 = vmatpush1.msra.mxu0 0.0
        %473 = vmatprep.subr.mxu0 0.0
        %474 = vmatpush1.msra.mxu0 0.0
        %475 = vmatprep.subr.mxu0 0.0
        %476 = vmatpush1.msra.mxu0 0.0
        %477 = vmatprep.subr.mxu0 0.0
        %478 = vmatpush1.msra.mxu0 0.0
        %479 = vmatprep.subr.mxu0 0.0
        %480 = vmatpush1.msra.mxu0 0.0
        %481 = vmatprep.subr.mxu0 0.0
        %482 = vmatpush1.msra.mxu0 0.0
        %483 = vmatprep.subr.mxu0 0.0
        %484 = vmatpush1.msra.mxu0 0.0
        %485 = vmatprep.subr.mxu0 0.0
        %486 = vmatpush1.msra.mxu0 0.0
        %487 = vmatprep.subr.mxu0 0.0
        %488 = vmatpush1.msra.mxu0 0.0
        %489 = vmatprep.subr.mxu0 0.0
        %490 = vmatpush1.msra.mxu0 0.0
        %491 = vmatprep.subr.mxu0 0.0
        %492 = vmatpush1.msra.mxu0 0.0
        %493 = vmatprep.subr.mxu0 0.0
        %494 = vmatpush1.msra.mxu0 0.0
        %495 = vmatprep.subr.mxu0 0.0
        %496 = vmatpush1.msra.mxu0 0.0
        %497 = vmatprep.subr.mxu0 0.0
        %498 = vmatpush1.msra.mxu0 0.0
        %499 = vmatprep.subr.mxu0 0.0
        %500 = vmatpush1.msra.mxu0 0.0
        %501 = vmatprep.mubr.f32.mxu0 0.0
        %502 = vmatmul.mubr.f32.gmra.mrb[0].mxu0 %v243
        %v503 = vpop.f32.mrb[0].mxu0
        %v504 = vadd.f32 %v435, %v503
        %v505 = vpop.f32.mrb[0].mxu0
        %506 = vmatprep.mubr.f32.mxu0 0.0
        %507 = vmatmul.mubr.f32.gmra.mrb[0].mxu0 %v246
        %v508 = vpop.f32.mrb[0].mxu0
        %v509 = vadd.f32 %v435, %v508
        %v510 = vpop.f32.mrb[0].mxu0
        %511 = vdwg.mxu0
        %s512 = scalar_lea.vmem %s221, 32 [#allocation7]
        %513 = vst [vmem:[%s512] sm:$0xff] %v504
        %514 = vst [vmem:[%s512 + $0x8] sm:$0xff] %v509
        %s515 = sand.u32 %s113, 1
        %s516 = scalar_lea.sflag [#allocation4], %s515
        %s517 = sand.u32 %s113, 1
        %s518 = smul.addr %s517, 48
        %s519 = scalar_lea.vmem [#allocation7], %s518
        // Predicated region
        $region41: #{tpu_custom_call.1} parent=31 // pred_check
          %p520 = pneg %p123
        $region42: #{tpu_custom_call.1} parent=31 // pred_check_branch
          %522 = sbr.rel (%p520) target = $region44
        $region43: #{tpu_custom_call.1} parent=31 // pred_region
          %s523 = smul.u32 2, %s26
          %s525 = ssub.s32 768, 768
          %526 = vsyncadd %s516, %s525
          %s527 = smul.addr %s25, 6
          %s528 = sadd.s32 %s523, %s527
          %s529 = smul.addr %s528, 128
          %s530 = scalar_lea.hbm %s3, %s529
          %s531 = sshll.u32 %s519, 4
          %s532 = int_to_ptr.vmem [resolvable:$true] %s531
          %537 = dma.vmem_to_hbm [thread:$0]  %s532, 768, %s530, %s516, 128, 128, 8
        $region44: #{tpu_custom_call.1} parent=31 // pred_fallthru
          _
      $region32: #{tpu_custom_call.1} parent=5 // pred_fallthru
        _
      %p538 = scmp.le.s32.totalorder 2, %s16
      // Predicated region
      $region45: #{tpu_custom_call.1} parent=5 // pred_check
        %p539 = pneg %p538
      $region46: #{tpu_custom_call.1} parent=5 // pred_check_branch
        %541 = sbr.rel (%p539) target = $region48
      $region47: #{tpu_custom_call.1} parent=5 // pred_region
        %s542 = ssub.s32 %s16, 2
        // Predicated region
        $region49: #{tpu_custom_call.1} parent=47 // pred_check
          %p543 = pneg %p129
        $region50: #{tpu_custom_call.1} parent=47 // pred_check_branch
          %545 = sbr.rel (%p543) target = $region52
        $region51: #{tpu_custom_call.1} parent=47 // pred_region
          %s546 = sand.u32 %s114, 1
          %s547 = scalar_lea.sflag [#allocation4], %s546
          %s548 = sand.u32 %s114, 1
          %s549 = smul.addr %s548, 48
          %s550 = scalar_lea.vmem [#allocation7], %s549
          %551 = dma.done %s547, 768
        $region52: #{tpu_custom_call.1} parent=47 // pred_fallthru
          _
      $region48: #{tpu_custom_call.1} parent=5 // pred_fallthru
        _
    $region6: #{tpu_custom_call.1} parent=1 // loop_footer
      %s20 = sadd.s32 1, %s16
    $region7: #{tpu_custom_call.1} parent=1 // loop_footer_branch
      %15 = sbr.rel target = $region3
    $region8: #{tpu_custom_call.1} parent=1 // loop_exit
      _
    %552 = vsyncpa [#allocation3], 1
    %s553 = scalar_lea.sflag [#allocation3], 1
    %554 = vsyncpa %s553, 1
    %555 = vsyncpa [#allocation6], 1
    %556 = vsyncpa [#allocation4], 1
    %s557 = scalar_lea.sflag [#allocation4], 1
    %558 = vsyncpa %s557, 1

</llo_original>
